<compile_context>
chip_gen: v5e
topology: v5e:2x2
jax: 0.10.0
libtpu: 0.0.40
codegen_flags: <defaults>
</compile_context>

<pallas_src>
import math
import numpy as np

import jax
import jax.numpy as jnp
from jax import lax
from jax.experimental import pallas as pl
from jax.experimental.pallas import tpu as pltpu


# ----------------------------------------------------------------------------
# small helpers
# ----------------------------------------------------------------------------
def _ceil_to(x, m):
    return ((x + m - 1) // m) * m


def _pad_rows(x, rows):
    pad = rows - x.shape[0]
    if pad == 0:
        return x
    return jnp.pad(x, ((0, pad),) + ((0, 0),) * (x.ndim - 1))


# ----------------------------------------------------------------------------
# Kernel 1: fused RMSNorm + in_proj   (feat (M, d_model) -> xz (M, 2*d_inner))
# ----------------------------------------------------------------------------
def _head_kernel(x_ref, g_ref, w_ref, o_ref):
    x = x_ref[...].astype(jnp.float32)                       # (tm, d_model)
    d = x.shape[-1]
    ss = jnp.sum(x * x, axis=-1, keepdims=True)              # (tm, 1)
    # F.normalize(dim=-1): x / max(||x||, 1e-12)  ==  x * rsqrt(max(ss, 1e-24))
    inv = (float(d) ** 0.5) * lax.rsqrt(jnp.maximum(ss, 1e-24))
    xn = x * inv * g_ref[...]                                 # RMSNorm
    o_ref[...] = jnp.dot(xn, w_ref[...],
                         preferred_element_type=jnp.float32).astype(o_ref.dtype)


def head_pallas(feat, rms_g, w_in, tm=512):
    m, d_model = feat.shape
    d_out = w_in.shape[1]
    tm = min(tm, _ceil_to(m, 8))                              # big tiles, sublane aligned
    mp = _ceil_to(m, tm)
    out = pl.pallas_call(
        _head_kernel,
        out_shape=jax.ShapeDtypeStruct((mp, d_out), feat.dtype),
        grid=(mp // tm,),
        in_specs=[
            pl.BlockSpec((tm, d_model), lambda i: (i, 0)),
            pl.BlockSpec((1, d_model), lambda i: (0, 0)),     # weights stay resident
            pl.BlockSpec((d_model, d_out), lambda i: (0, 0)),
        ],
        out_specs=pl.BlockSpec((tm, d_out), lambda i: (i, 0)),
        compiler_params=pltpu.CompilerParams(dimension_semantics=("parallel",)),
    )(_pad_rows(feat, mp), rms_g.reshape(1, d_model), w_in)
    return out[:m]


def head_ref(feat, rms_g, w_in):
    d = feat.shape[-1]
    ss = jnp.sum(feat * feat, axis=-1, keepdims=True)
    xn = feat / jnp.maximum(jnp.sqrt(ss), 1e-12) * (d ** 0.5) * rms_g
    return jnp.dot(xn, w_in, precision=lax.Precision.HIGHEST)


# ----------------------------------------------------------------------------
# Kernel 2: selective scan (SSM core)
# ----------------------------------------------------------------------------
def _make_scan_kernel(lc, n_state, unroll):
    def kernel(u_ref, dt_ref, b_ref, c_ref, a_ref, d_ref, db_ref,
               y_ref, h_state, a_s, b_s, hh_s):
        # u_ref, dt_ref, y_ref : (1, lc, td)     channel tile on lanes
        # b_ref, c_ref         : (1, 1, lc, ns)
        # a_ref                : (ns, td)        A = -exp(A_log), state dim on sublanes
        # d_ref, db_ref        : (1, td)         skip D, delta bias
        # h_state              : (ns, td)        SSM state carried across L-chunks
        # a_s, b_s, hh_s       : (lc, ns, td)    per-chunk decay / drive / state history
        chunk = pl.program_id(2)

        @pl.when(chunk == 0)
        def _init():
            h_state[...] = jnp.zeros_like(h_state)

        u = u_ref[0]                                          # (lc, td)
        raw = dt_ref[0] + db_ref[...]                         # (lc, td)
        # exact, numerically stable softplus (matches F.softplus)
        dt = jnp.maximum(raw, 0.0) + jnp.log(1.0 + jnp.exp(-jnp.abs(raw)))
        dtu = dt * u
        a = a_ref[...]                                        # (ns, td)
        bmat = b_ref[0, 0]                                    # (lc, ns)
        cmat = c_ref[0, 0]                                    # (lc, ns)

        # Vectorised per-chunk decay / drive; state dim packed on sublanes so every time
        # slice a_s[t] / b_s[t] is one dense (ns, td) tile.
        a_s[...] = jnp.exp(dt[:, None, :] * a[None, :, :])
        b_s[...] = dtu[:, None, :] * bmat[:, :, None]

        # Serial recurrence h_t = a_t * h_{t-1} + b_t, manually unrolled 8x so the LLO
        # scheduler can overlap step t+1 loads with step t compute.
        def step(i, h):
            base = i * unroll
            for s in range(unroll):
                t = base + s
                h = a_s[t] * h + b_s[t]
                hh_s[t] = h
            return h

        h_state[...] = lax.fori_loop(0, lc // unroll, step, h_state[...])

        # Vectorised readout y_t = C_t . h_t + D * u_t (sublane reduce over the state dim).
        y = jnp.sum(cmat[:, :, None] * hh_s[...], axis=1) + u * d_ref[...]
        y_ref[0] = y.astype(y_ref.dtype)

    return kernel


def selective_scan_pallas(u, delta, A, Bmat, Cmat, Dvec, delta_bias, lc_max=256):
    """u, delta: (B, L, K*D) f32 channel-last; A: (K*D, N); Bmat, Cmat: (B, K, L, N);
    Dvec, delta_bias: (K*D,).  Returns y: (B, L, K*D) f32.

    Channels are padded per scan direction to a multiple of 128 so every block is
    lane-dense; padded channels / timesteps are mathematically inert and sliced off."""
    bb, L, kd = u.shape
    _, k_dirs, _, ns = Bmat.shape
    d_inner = kd // k_dirs

    td = 128
    d_pad = _ceil_to(d_inner, td)
    kd_pad = k_dirs * d_pad
    tiles_per_dir = d_pad // td
    n_d = kd_pad // td

    lc = min(lc_max, _ceil_to(L, 8))                          # always a multiple of 8
    lp = _ceil_to(L, lc)
    n_c = lp // lc
    padl = lp - L
    unroll = 8                                                # divides lc (lc % 8 == 0)

    def pad_seq_chan(x):                                      # (B, L, KD) -> (B, Lp, KDp)
        x = x.reshape(bb, L, k_dirs, d_inner)
        x = jnp.pad(x, ((0, 0), (0, padl), (0, 0), (0, d_pad - d_inner)))
        return x.reshape(bb, lp, kd_pad)

    def pad_chan_vec(v):                                      # (KD,) -> (1, KDp)
        v = v.reshape(k_dirs, d_inner)
        v = jnp.pad(v, ((0, 0), (0, d_pad - d_inner)))
        return v.reshape(1, kd_pad)

    u_p = pad_seq_chan(u)
    dt_p = pad_seq_chan(delta)
    b_p = jnp.pad(Bmat, ((0, 0), (0, 0), (0, padl), (0, 0)))
    c_p = jnp.pad(Cmat, ((0, 0), (0, 0), (0, padl), (0, 0)))
    a_p = jnp.pad(A.reshape(k_dirs, d_inner, ns),
                  ((0, 0), (0, d_pad - d_inner), (0, 0))).reshape(kd_pad, ns).T  # (N, KDp)
    d_p = pad_chan_vec(Dvec)
    db_p = pad_chan_vec(delta_bias)

    def seq_map(b, j, c):
        return (b, c, j)

    def bc_map(b, j, c):
        return (b, j // tiles_per_dir, c, 0)

    def chan_map(b, j, c):
        return (0, j)

    cost = pl.CostEstimate(
        flops=int(bb * kd_pad * lp * (6 * ns + 8)),
        transcendentals=int(bb * kd_pad * lp * (ns + 2)),
        bytes_accessed=int(4 * (3 * bb * lp * kd_pad + 2 * bb * k_dirs * lp * ns
                                + (ns + 2) * kd_pad)),
    )

    y = pl.pallas_call(
        _make_scan_kernel(lc, ns, unroll),
        out_shape=jax.ShapeDtypeStruct((bb, lp, kd_pad), jnp.float32),
        grid_spec=pltpu.PrefetchScalarGridSpec(
            num_scalar_prefetch=0,
            grid=(bb, n_d, n_c),
            in_specs=[
                pl.BlockSpec((1, lc, td), seq_map),
                pl.BlockSpec((1, lc, td), seq_map),
                pl.BlockSpec((1, 1, lc, ns), bc_map),
                pl.BlockSpec((1, 1, lc, ns), bc_map),
                pl.BlockSpec((ns, td), chan_map),
                pl.BlockSpec((1, td), chan_map),
                pl.BlockSpec((1, td), chan_map),
            ],
            out_specs=pl.BlockSpec((1, lc, td), seq_map),
            scratch_shapes=[
                pltpu.VMEM((ns, td), jnp.float32),        # carried SSM state
                pltpu.VMEM((lc, ns, td), jnp.float32),    # decay a_t
                pltpu.VMEM((lc, ns, td), jnp.float32),    # drive b_t
                pltpu.VMEM((lc, ns, td), jnp.float32),    # per-step state history
            ],
        ),
        compiler_params=pltpu.CompilerParams(
            dimension_semantics=("parallel", "parallel", "arbitrary"),
            vmem_limit_bytes=32 * 1024 * 1024),
        cost_estimate=cost,
    )(u_p, dt_p, b_p, c_p, a_p, d_p, db_p)

    y = y.reshape(bb, lp, k_dirs, d_pad)[:, :L, :, :d_inner]
    return y.reshape(bb, L, kd)


def selective_scan_ref(u, delta, A, Bmat, Cmat, Dvec, delta_bias):
    # channel-last reference: u, delta (B, L, KD); Bmat/Cmat (B, K, L, N)
    bb, L, kd = u.shape
    k_dirs, ns = Bmat.shape[1], Bmat.shape[-1]
    d_inner = kd // k_dirs
    dt = jax.nn.softplus(delta + delta_bias[None, None, :])                 # (B, L, KD)
    bg = jnp.repeat(Bmat, d_inner, axis=1).transpose(0, 2, 1, 3)            # (B, L, KD, N)
    cg = jnp.repeat(Cmat, d_inner, axis=1).transpose(0, 2, 1, 3)
    da = jnp.exp(dt[..., None] * A[None, None, :, :])                       # (B, L, KD, N)
    dbu = (dt * u)[..., None] * bg

    def step(h, xs):
        da_t, dbu_t, c_t = xs
        h = da_t * h + dbu_t
        return h, jnp.sum(c_t * h, axis=-1)

    h0 = jnp.zeros((bb, kd, ns), jnp.float32)
    _, ys = lax.scan(step, h0, (jnp.moveaxis(da, 1, 0),
                                jnp.moveaxis(dbu, 1, 0),
                                jnp.moveaxis(cg, 1, 0)))
    return jnp.moveaxis(ys, 0, 1) + Dvec[None, None, :] * u


# ----------------------------------------------------------------------------
# Kernel 3: fused LayerNorm + gelu(z) gate + out_proj + residual
# ----------------------------------------------------------------------------
def _tail_kernel(y_ref, z_ref, sc_ref, gam_ref, bet_ref, w_ref, o_ref):
    y = y_ref[...].astype(jnp.float32)                        # (tm, d_inner)
    mu = jnp.mean(y, axis=-1, keepdims=True)
    yc = y - mu
    var = jnp.mean(yc * yc, axis=-1, keepdims=True)
    yn = yc * lax.rsqrt(var + 1e-5) * gam_ref[...] + bet_ref[...]
    gate = jax.nn.gelu(z_ref[...].astype(jnp.float32), approximate=False)
    proj = jnp.dot(yn * gate, w_ref[...], preferred_element_type=jnp.float32)
    o_ref[...] = (sc_ref[...].astype(jnp.float32) + proj).astype(o_ref.dtype)


def tail_pallas(y, z, shortcut, ln_g, ln_b, w_out, tm=512):
    m, d_inner = y.shape
    d_model = w_out.shape[1]
    tm = min(tm, _ceil_to(m, 8))
    mp = _ceil_to(m, tm)
    out = pl.pallas_call(
        _tail_kernel,
        out_shape=jax.ShapeDtypeStruct((mp, d_model), shortcut.dtype),
        grid=(mp // tm,),
        in_specs=[
            pl.BlockSpec((tm, d_inner), lambda i: (i, 0)),
            pl.BlockSpec((tm, d_inner), lambda i: (i, 0)),
            pl.BlockSpec((tm, d_model), lambda i: (i, 0)),
            pl.BlockSpec((1, d_inner), lambda i: (0, 0)),
            pl.BlockSpec((1, d_inner), lambda i: (0, 0)),
            pl.BlockSpec((d_inner, d_model), lambda i: (0, 0)),
        ],
        out_specs=pl.BlockSpec((tm, d_model), lambda i: (i, 0)),
        compiler_params=pltpu.CompilerParams(dimension_semantics=("parallel",)),
    )(_pad_rows(y, mp), _pad_rows(z, mp), _pad_rows(shortcut, mp),
      ln_g.reshape(1, d_inner), ln_b.reshape(1, d_inner), w_out)
    return out[:m]


def tail_ref(y, z, shortcut, ln_g, ln_b, w_out):
    mu = jnp.mean(y, axis=-1, keepdims=True)
    var = jnp.mean((y - mu) ** 2, axis=-1, keepdims=True)
    yn = (y - mu) * lax.rsqrt(var + 1e-5) * ln_g + ln_b
    gate = jax.nn.gelu(z, approximate=False)
    return shortcut + jnp.dot(yn * gate, w_out, precision=lax.Precision.HIGHEST)


# ----------------------------------------------------------------------------
# XLA glue: grouped conv1d (channel-last, PyTorch semantics) + full SS2D forward
# ----------------------------------------------------------------------------
def grouped_conv1d_nlc(x, w, b, groups):
    """x: (B, L, C) channel-last; w: (C_out, C_in//groups, k) (PyTorch Conv1d layout);
    b: (C_out,).  padding = k - 2 ('same' for k=3), matching the module."""
    # TODO(synk): fuse this depthwise conv into the scan kernel (needs a 1-step L halo).
    k = w.shape[-1]
    out = lax.conv_general_dilated(
        x, jnp.transpose(w, (2, 1, 0)), window_strides=(1,),
        padding=((k - 2, k - 2),),
        dimension_numbers=("NHC", "HIO", "NHC"), feature_group_count=groups)
    return out + b[None, None, :]


def ss2d_forward(params, feat, order, inverse, counts, use_pallas=True):
    """SS2D.forward.  feat: (M, d_model); order/inverse: (K, M) int; counts: python list of
    per-point-cloud sizes (torch `offsets` == cumsum(counts); kept host-side so all shapes
    stay static)."""
    head = head_pallas if use_pallas else head_ref
    scan = selective_scan_pallas if use_pallas else selective_scan_ref
    tail = tail_pallas if use_pallas else tail_ref

    k_dirs, d_inner, dt_rank = params["dt_projs_weight"].shape
    d_state = params["A_logs"].shape[-1]

    shortcut = feat

    # RMSNorm + in_proj, split into x and gate z
    xz = head(feat, params["rms_g"], params["w_in"])          # (M, 2*d_inner)
    x, z = xz[:, :d_inner], xz[:, d_inner:]

    # serialization gather + cyclic padding (compute_padding, patch_size=None),
    # kept sequence-major / channel-last so no activation transposes are needed downstream
    counts = [int(c) for c in counts]
    nb = len(counts)
    max_bin = max(counts)
    starts = np.concatenate([[0], np.cumsum(counts)[:-1]]).astype(np.int64)
    padded_idx = jnp.asarray(
        np.concatenate([np.arange(max_bin) % c + s for c, s in zip(counts, starts)]),
        jnp.int32)

    xs = jnp.stack([x[order[k]][padded_idx].reshape(nb, max_bin, d_inner)
                    for k in range(k_dirs)], axis=1)          # (B, K, L, D)

    # input-dependent projections
    x_dbl = jnp.einsum("bkld,kcd->bklc", xs, params["x_proj_weight"])
    dts = x_dbl[..., :dt_rank]
    bs = x_dbl[..., dt_rank:dt_rank + d_state]                # (B, K, L, N)
    cs = x_dbl[..., dt_rank + d_state:]                       # (B, K, L, N)
    dts = jnp.einsum("bklr,kdr->bkld", dts, params["dt_projs_weight"])

    # channel-last flatten; channel index = k*D + d (matches torch xs.view(B, K*D, L))
    xs_flat = xs.transpose(0, 2, 1, 3).reshape(nb, max_bin, k_dirs * d_inner)
    dts_flat = dts.transpose(0, 2, 1, 3).reshape(nb, max_bin, k_dirs * d_inner)
    xs_flat = xs_flat.astype(jnp.float32)
    dts_flat = dts_flat.astype(jnp.float32)

    # depthwise/grouped conv over the padded sequences (groups = d_inner)
    xs_flat = grouped_conv1d_nlc(xs_flat, params["conv_w"], params["conv_b"],
                                 groups=d_inner)

    a_mat = -jnp.exp(params["A_logs"].astype(jnp.float32))    # (K*D, N)
    d_vec = params["Ds"].astype(jnp.float32)
    delta_bias = params["dt_projs_bias"].reshape(-1).astype(jnp.float32)

    # selective scan
    ys = scan(xs_flat, dts_flat, a_mat,
              bs.astype(jnp.float32), cs.astype(jnp.float32), d_vec, delta_bias)
    ys = ys.reshape(nb, max_bin, k_dirs, d_inner)             # (B, L, K, D)

    # un-pad per cloud, merge scan directions, undo serialization (all row-gathers)
    ys = jnp.concatenate([ys[i, :c] for i, c in enumerate(counts)], axis=0)   # (M, K, D)
    y = ys[inverse[0], 0, :]
    for k in range(1, min(k_dirs, 4)):
        y = y + ys[inverse[k], k, :]
    # TODO(synk): K >= 4 reversed directions (enable_inversion=True) not implemented (K=1 here).

    # LayerNorm + gelu(z) gate + out_proj + residual
    return tail(y, z, shortcut, params["ln_g"], params["ln_b"], params["w_out"])


# ----------------------------------------------------------------------------
# demo
# ----------------------------------------------------------------------------
if __name__ == "__main__":
    key = jax.random.PRNGKey(0)
    ks = jax.random.split(key, 16)

    d_model = 32
    d_state = 8
    ssm_ratio = 2
    d_inner = d_model * ssm_ratio            # 64
    dt_rank = math.ceil(d_model / 16)        # 2
    k_dirs = 1                               # K
    counts = [10, 14]                        # two point clouds -> offsets [10, 24]
    m_total = sum(counts)

    feat = jax.random.normal(ks[0], (m_total, d_model), jnp.float32)

    # batch-contiguous serialized orders (as produced by point serialization)
    order_rows, start = [], 0
    for i, c in enumerate(counts):
        order_rows.append(jax.random.permutation(ks[1 + i], c) + start)
        start += c
    order = jnp.concatenate(order_rows)[None, :].astype(jnp.int32)       # (K, M)
    inverse = jnp.argsort(order, axis=-1).astype(jnp.int32)

    def unif(k, shape, lim):
        return jax.random.uniform(k, shape, jnp.float32, -lim, lim)

    dt_raw = jnp.exp(jax.random.uniform(ks[5], (k_dirs, d_inner))
                     * (math.log(0.1) - math.log(0.001)) + math.log(0.001))
    dt_raw = jnp.maximum(dt_raw, 1e-4)

    params = {
        "rms_g": 1.0 + 0.1 * jax.random.normal(ks[3], (d_model,), jnp.float32),
        "w_in": unif(ks[4], (d_model, 2 * d_inner), 1.0 / math.sqrt(d_model)),
        "x_proj_weight": unif(ks[6], (k_dirs, dt_rank + 2 * d_state, d_inner),
                              1.0 / math.sqrt(d_inner)),
        "dt_projs_weight": unif(ks[7], (k_dirs, d_inner, dt_rank), dt_rank ** -0.5),
        "dt_projs_bias": (dt_raw + jnp.log(-jnp.expm1(-dt_raw))).astype(jnp.float32),
        "A_logs": jnp.log(jnp.tile(
            jnp.arange(1, d_state + 1, dtype=jnp.float32)[None, :],
            (k_dirs * d_inner, 1))),
        "Ds": jnp.ones((k_dirs * d_inner,), jnp.float32),
        "conv_w": unif(ks[8], (k_dirs * d_inner, k_dirs, 3), 1.0 / math.sqrt(3 * k_dirs)),
        "conv_b": unif(ks[9], (k_dirs * d_inner,), 1.0 / math.sqrt(3 * k_dirs)),
        "ln_g": 1.0 + 0.1 * jax.random.normal(ks[10], (d_inner,), jnp.float32),
        "ln_b": 0.05 * jax.random.normal(ks[11], (d_inner,), jnp.float32),
        "w_out": unif(ks[12], (d_inner, d_model), 1.0 / math.sqrt(d_inner)),
    }

    out = ss2d_forward(params, feat, order, inverse, counts, use_pallas=True)
    out = jax.block_until_ready(out)
    assert out.shape == (m_total, d_model), out.shape
    assert bool(jnp.all(jnp.isfinite(out)))

    ref = ss2d_forward(params, feat, order, inverse, counts, use_pallas=False)
    err = float(jnp.max(jnp.abs(out - ref)))
    assert err < 1e-2, err

    print("KERNEL_OK")
</pallas_src>

<mosaic_0001>
module attributes {stable_mosaic.version = 11 : i64} {
  func.func @_head_kernel(%arg0: i32, %arg1: memref<24x32xf32, #tpu.memory_space<vmem>>, %arg2: memref<1x32xf32, #tpu.memory_space<vmem>>, %arg3: memref<32x128xf32, #tpu.memory_space<vmem>>, %arg4: memref<24x128xf32, #tpu.memory_space<vmem>>) attributes {dimension_semantics = [#tpu.dimension_semantics<parallel>], iteration_bounds = array<i64: 1>, scalar_prefetch = 0 : i64, scratch_operands = 0 : i64, tpu.core_type = #tpu.core_type<tc>, window_params = [{transform_indices = @transform_0, window_bounds = array<i64: 24, 32>}, {pipeline_mode = #tpu.pipeline_mode<synchronous>, transform_indices = @transform_1, window_bounds = array<i64: 1, 32>}, {pipeline_mode = #tpu.pipeline_mode<synchronous>, transform_indices = @transform_2, window_bounds = array<i64: 32, 128>}, {transform_indices = @transform_3, window_bounds = array<i64: 24, 128>}]} {
    %c0 = arith.constant 0 : index
    %c0_0 = arith.constant 0 : index
    %0 = vector.load %arg1[%c0, %c0_0] : memref<24x32xf32, #tpu.memory_space<vmem>>, vector<24x32xf32>
    %1 = arith.mulf %0, %0 : vector<24x32xf32>
    %cst = arith.constant dense<0.000000e+00> : vector<24xf32>
    %2 = vector.multi_reduction <add>, %1, %cst [1] : vector<24x32xf32> to vector<24xf32>
    %3 = vector.shape_cast %2 : vector<24xf32> to vector<24x1xf32>
    %cst_1 = arith.constant 1.000000e-24 : f32
    %4 = vector.broadcast %cst_1 : f32 to vector<24x1xf32>
    %5 = arith.maximumf %3, %4 : vector<24x1xf32>
    %6 = math.rsqrt %5 : vector<24x1xf32>
    %cst_2 = arith.constant 5.65685415 : f32
    %7 = vector.broadcast %cst_2 : f32 to vector<24x1xf32>
    %8 = arith.mulf %7, %6 : vector<24x1xf32>
    %9 = vector.broadcast %8 : vector<24x1xf32> to vector<24x32xf32>
    %10 = arith.mulf %0, %9 : vector<24x32xf32>
    %c0_3 = arith.constant 0 : index
    %c0_4 = arith.constant 0 : index
    %11 = vector.load %arg2[%c0_3, %c0_4] : memref<1x32xf32, #tpu.memory_space<vmem>>, vector<1x32xf32>
    %12 = vector.broadcast %11 : vector<1x32xf32> to vector<24x32xf32>
    %13 = arith.mulf %10, %12 : vector<24x32xf32>
    %c0_5 = arith.constant 0 : index
    %c0_6 = arith.constant 0 : index
    %14 = vector.load %arg3[%c0_5, %c0_6] : memref<32x128xf32, #tpu.memory_space<vmem>>, vector<32x128xf32>
    %cst_7 = arith.constant dense<0.000000e+00> : vector<24x128xf32>
    %15 = tpu.matmul %13, %14, %cst_7 {dimension_numbers = #tpu.dot_dimension_numbers<[1], [0], [0], [1], [0, 0, 1, 1], [], []>} : vector<24x32xf32>, vector<32x128xf32>, vector<24x128xf32> -> vector<24x128xf32>
    %c0_8 = arith.constant 0 : index
    %c0_9 = arith.constant 0 : index
    %16 = vector.load %arg4[%c0_8, %c0_9] : memref<24x128xf32, #tpu.memory_space<vmem>>, vector<24x128xf32>
    tpu.vector_store %arg4[%c0_8, %c0_9], %15 {strides = array<i32>} : memref<24x128xf32, #tpu.memory_space<vmem>>, vector<24x128xf32>,
    return
  }
  func.func @transform_0(%arg0: i32) -> (i32, i32) {
    %c0_i32 = arith.constant 0 : i32
    %c0_i32_0 = arith.constant 0 : i32
    return %arg0, %c0_i32 : i32, i32
  }
  func.func @transform_1(%arg0: i32) -> (i32, i32) {
    %c0_i32 = arith.constant 0 : i32
    %c0_i32_0 = arith.constant 0 : i32
    %c0_i32_1 = arith.constant 0 : i32
    return %c0_i32, %c0_i32_0 : i32, i32
  }
  func.func @transform_2(%arg0: i32) -> (i32, i32) {
    %c0_i32 = arith.constant 0 : i32
    %c0_i32_0 = arith.constant 0 : i32
    %c0_i32_1 = arith.constant 0 : i32
    return %c0_i32, %c0_i32_0 : i32, i32
  }
  func.func @transform_3(%arg0: i32) -> (i32, i32) {
    %c0_i32 = arith.constant 0 : i32
    %c0_i32_0 = arith.constant 0 : i32
    return %arg0, %c0_i32 : i32, i32
  }
}

</mosaic_0001>

<llo_original>
// kernel: tpu_custom_call.1
$region0: #{tpu_custom_call.1}
  #allocation0 [shape = 'u32[]', space=smem, size = 0x4, offset = 0x4, fixed_abs, tag = 'smem constant byte address 0x4 - core index']
  #allocation1 [shape = 'u32[72,128]{1,0:T(1,128)}', space=vmem, size = 0x9000, scoped, tag = 'internal scratch']
  %s0 = inlined_call_operand.hbm [shape: f32[24,32], index: 0, kind: input, shape index: {}]
  %s1 = inlined_call_operand.hbm [shape: f32[1,32], index: 1, kind: input, shape index: {}]
  %s2 = inlined_call_operand.hbm [shape: f32[32,128], index: 2, kind: input, shape index: {}]
  %s3 = inlined_call_operand.hbm [shape: f32[24,128], index: 3, kind: output, shape index: {}]
  %s4 = sld [smem:[#allocation0]]
  $region34: #{tpu_custom_call.1} parent=0
    _
  %s6 = ssub.s32 1, %s4
  %s7 = scalar_select 0, %s6, %s4
  $region1: #{tpu_custom_call.1} parent=0
    #allocation2 [shape = 'u8[12288]{0}', space=vmem, size = 0x3000, scoped, tag = 'input window, operand 0, single buffered']
    #allocation3 [shape = 's32[1]{0}', space=sflag, size = 0x4, scoped, tag = 'scoped memory for tpu_custom_call.1']
    #allocation4 [shape = 's32[1]{0}', space=sflag, size = 0x4, scoped, tag = 'scoped memory for tpu_custom_call.1']
    #allocation5 [shape = 'u8[512]{0}', space=vmem, size = 0x400, scoped, tag = 'input window, operand 1, single buffered']
    #allocation6 [shape = 's32[1]{0}', space=sflag, size = 0x4, scoped, tag = 'scoped memory for tpu_custom_call.1']
    #allocation7 [shape = 'u8[16384]{0}', space=vmem, size = 0x4000, scoped, tag = 'input window, operand 2, single buffered']
    #allocation8 [shape = 'u8[12288]{0}', space=vmem, size = 0x3000, scoped, tag = 'output window, operand 0, single buffered']
    %8 = vsyncpa [#allocation3], 0
    %9 = vsyncpa [#allocation6], 0
    %10 = vsyncpa [#allocation4], 0
    // Predicated region
    $region2: #{tpu_custom_call.1} parent=1 // pred_check
      _
    $region3: #{tpu_custom_call.1} parent=1 // pred_check_branch
      %12 = sbr.rel (0) target = $region5
    $region4: #{tpu_custom_call.1} parent=1 // pred_region
      %14 = vsyncadd [#allocation3], 0
      %s15 = sshll.u32 %s0, 4
      %s16 = int_to_ptr.hbm [resolvable:$true] %s15
      %s17 = sshll.u32 [#allocation2], 4
      %s18 = int_to_ptr.vmem [resolvable:$true] %s17
      %23 = dma.hbm_to_vmem [thread:$0]  %s16, 384, %s18, [#allocation3], 128, 128, 8
    $region5: #{tpu_custom_call.1} parent=1 // pred_fallthru
      _
    // Predicated region
    $region6: #{tpu_custom_call.1} parent=1 // pred_check
      _
    $region7: #{tpu_custom_call.1} parent=1 // pred_check_branch
      %25 = sbr.rel (0) target = $region9
    $region8: #{tpu_custom_call.1} parent=1 // pred_region
      %27 = vsyncadd [#allocation6], 0
      %s29 = sshll.u32 %s1, 4
      %s30 = int_to_ptr.hbm [resolvable:$true] %s29
      %s31 = sshll.u32 [#allocation5], 4
      %s32 = int_to_ptr.vmem [resolvable:$true] %s31
      %34 = dma.hbm_to_vmem [thread:$0]  %s30, 16, %s32, [#allocation6]
    $region9: #{tpu_custom_call.1} parent=1 // pred_fallthru
      _
    // Predicated region
    $region10: #{tpu_custom_call.1} parent=1 // pred_check
      _
    $region11: #{tpu_custom_call.1} parent=1 // pred_check_branch
      %36 = sbr.rel (0) target = $region13
    $region12: #{tpu_custom_call.1} parent=1 // pred_region
      %38 = vsyncadd [#allocation6], 0
      %s39 = sshll.u32 %s2, 4
      %s40 = int_to_ptr.hbm [resolvable:$true] %s39
      %s41 = sshll.u32 [#allocation7], 4
      %s42 = int_to_ptr.vmem [resolvable:$true] %s41
      %47 = dma.hbm_to_vmem [thread:$0]  %s40, 512, %s42, [#allocation6], 128, 128, 8
    $region13: #{tpu_custom_call.1} parent=1 // pred_fallthru
      _
    // Predicated region
    $region14: #{tpu_custom_call.1} parent=1 // pred_check
      _
    $region15: #{tpu_custom_call.1} parent=1 // pred_check_branch
      %49 = sbr.rel (0) target = $region17
    $region16: #{tpu_custom_call.1} parent=1 // pred_region
      %51 = dma.done [#allocation3], 384
    $region17: #{tpu_custom_call.1} parent=1 // pred_fallthru
      _
    // Predicated region
    $region18: #{tpu_custom_call.1} parent=1 // pred_check
      _
    $region19: #{tpu_custom_call.1} parent=1 // pred_check_branch
      %53 = sbr.rel (0) target = $region21
    $region20: #{tpu_custom_call.1} parent=1 // pred_region
      %55 = dma.done [#allocation6], 16
    $region21: #{tpu_custom_call.1} parent=1 // pred_fallthru
      _
    // Predicated region
    $region22: #{tpu_custom_call.1} parent=1 // pred_check
      _
    $region23: #{tpu_custom_call.1} parent=1 // pred_check_branch
      %57 = sbr.rel (0) target = $region25
    $region24: #{tpu_custom_call.1} parent=1 // pred_region
      %59 = dma.done [#allocation6], 512
    $region25: #{tpu_custom_call.1} parent=1 // pred_fallthru
      _
    %v60 = vld [vmem:[#allocation2] sm:$0xff]
    %v61 = vld [vmem:[#allocation2 + $0x8] sm:$0xff]
    %v62 = vld [vmem:[#allocation2 + $0x10] sm:$0xff]
    %v63 = vmul.f32 %v60, %v60
    %v64 = vmul.f32 %v61, %v61
    %v65 = vmul.f32 %v62, %v62
    %vm66 = vcmask 261120
    %v67 = vsel %vm66, %v63, 0.0
    %68 = vadd.xlane.f32.xlu0 %v67
    %v69 = vpop.xlane.xlu0 %68
    %v70 = vsel %vm66, %v64, 0.0
    %71 = vadd.xlane.f32.xlu0 %v70
    %v72 = vpop.xlane.xlu0 %71
    %v73 = vsel %vm66, %v65, 0.0
    %74 = vadd.xlane.f32.xlu0 %v73
    %v75 = vpop.xlane.xlu0 %74
    %v76 = vmax.f32 %v69, 1e-24
    %v77 = vmax.f32 %v72, 1e-24
    %v78 = vmax.f32 %v75, 1e-24
    %v79 = vrsqrt.pop %v76
    %v80 = vmul.f32 %v79, %v76
    %v81 = vmul.f32 %v80, %v79
    %v82 = vmul.f32 0.5, %v81
    %v83 = vsub.f32 1.5, %v82
    %v84 = vmul.f32 %v79, %v83
    %vm85 = vweird.f32 %v76
    %vm86 = vweird.f32 %v79
    %vm87 = vmor %vm85, %vm86
    %v88 = vsel %vm87, %v79, %v84
    %v89 = vrsqrt.pop %v77
    %v90 = vmul.f32 %v89, %v77
    %v91 = vmul.f32 %v90, %v89
    %v92 = vmul.f32 0.5, %v91
    %v93 = vsub.f32 1.5, %v92
    %v94 = vmul.f32 %v89, %v93
    %vm95 = vweird.f32 %v77
    %vm96 = vweird.f32 %v89
    %vm97 = vmor %vm95, %vm96
    %v98 = vsel %vm97, %v89, %v94
    %v99 = vrsqrt.pop %v78
    %v100 = vmul.f32 %v99, %v78
    %v101 = vmul.f32 %v100, %v99
    %v102 = vmul.f32 0.5, %v101
    %v103 = vsub.f32 1.5, %v102
    %v104 = vmul.f32 %v99, %v103
    %vm105 = vweird.f32 %v78
    %vm106 = vweird.f32 %v99
    %vm107 = vmor %vm105, %vm106
    %v108 = vsel %vm107, %v99, %v104
    %v109 = vmul.f32 %v88, 5.656854
    %v110 = vmul.f32 %v98, 5.656854
    %v111 = vmul.f32 %v108, 5.656854
    %v112 = vmul.f32 %v60, %v109
    %v113 = vmul.f32 %v61, %v110
    %v114 = vmul.f32 %v62, %v111
    %v115 = vld [vmem:[#allocation5] sm:$0x1]
    %v117 = vperm.slane %v115, 0
    %v119 = vmul.f32 %v112, %v117
    %v120 = vmul.f32 %v113, %v117
    %v121 = vmul.f32 %v114, %v117
    %v122 = vld [vmem:[#allocation7] sm:$0xff]
    %v123 = vld [vmem:[#allocation7 + $0x8] sm:$0xff]
    %v124 = vld [vmem:[#allocation7 + $0x10] sm:$0xff]
    %v125 = vld [vmem:[#allocation7 + $0x18] sm:$0xff]
    %v127 = vsel %vm66, %v119, 0
    %v130 = vsel %vm66, %v120, 0
    %v133 = vsel %vm66, %v121, 0
    %135 = vmatpush.msra.mxu0 0.0
    %136 = vmatpush.msra.mxu0 0.0
    %137 = vmatpush.msra.mxu0 0.0
    %138 = vmatpush.msra.mxu0 0.0
    %139 = vmatpush.msra.mxu0 0.0
    %140 = vmatpush.msra.mxu0 0.0
    %141 = vmatpush.msra.mxu0 0.0
    %142 = vmatpush.msra.mxu0 0.0
    %143 = vmatpush.msra.mxu0 0.0
    %144 = vmatpush.msra.mxu0 0.0
    %145 = vmatpush.msra.mxu0 0.0
    %146 = vmatpush.msra.mxu0 0.0
    %147 = vmatpush.msra.mxu0 %v125
    %148 = vmatpush.msra.mxu0 %v124
    %149 = vmatpush.msra.mxu0 %v123
    %150 = vmatpush.msra.mxu0 %v122
    %151 = vmatmul.f32.gmra.mxu0 %v127
    %v152 = vpop.f32.mrf.mxu0
    %v153 = vadd.f32 0.0, %v152
    %154 = vmatmul.f32.gmra.mxu0 %v130
    %v155 = vpop.f32.mrf.mxu0
    %v156 = vadd.f32 0.0, %v155
    %157 = vmatmul.f32.gmra.mxu0 %v133
    %v158 = vpop.f32.mrf.mxu0
    %v159 = vadd.f32 0.0, %v158
    %160 = vdwg.mxu0
    %161 = vst [vmem:[#allocation8] sm:$0xff] %v153
    %162 = vst [vmem:[#allocation8 + $0x8] sm:$0xff] %v156
    %163 = vst [vmem:[#allocation8 + $0x10] sm:$0xff] %v159
    // Predicated region
    $region26: #{tpu_custom_call.1} parent=1 // pred_check
      _
    $region27: #{tpu_custom_call.1} parent=1 // pred_check_branch
      %165 = sbr.rel (0) target = $region29
    $region28: #{tpu_custom_call.1} parent=1 // pred_region
      %167 = vsyncadd [#allocation4], 0
      %s168 = sshll.u32 [#allocation8], 4
      %s169 = int_to_ptr.vmem [resolvable:$true] %s168
      %s170 = sshll.u32 %s3, 4
      %s171 = int_to_ptr.hbm [resolvable:$true] %s170
      %176 = dma.vmem_to_hbm [thread:$0]  %s169, 384, %s171, [#allocation4], 128, 128, 8
    $region29: #{tpu_custom_call.1} parent=1 // pred_fallthru
      _
    // Predicated region
    $region30: #{tpu_custom_call.1} parent=1 // pred_check
      _
    $region31: #{tpu_custom_call.1} parent=1 // pred_check_branch
      %178 = sbr.rel (0) target = $region33
    $region32: #{tpu_custom_call.1} parent=1 // pred_region
      %180 = dma.done [#allocation4], 384
    $region33: #{tpu_custom_call.1} parent=1 // pred_fallthru
      _
    %181 = vsyncpa [#allocation3], 1
    %182 = vsyncpa [#allocation6], 1
    %183 = vsyncpa [#allocation4], 1

</llo_original>
